<compile_context>
chip_gen: v5e
topology: v5e:2x2
jax: 0.10.0
libtpu: 0.0.40
codegen_flags: <defaults>
</compile_context>

<pallas_src>
import functools
import math

import jax
import jax.numpy as jnp
from jax.experimental import pallas as pl
from jax.experimental.pallas import tpu as pltpu

LANE = 128


def _round_up(n, m):
    return ((n + m - 1) // m) * m


def _cdiv(a, b):
    return -(-a // b)


def _leaky_relu(x, alpha):
    return jnp.where(x > 0, x, alpha * x)


# ---------------------------------------------------------------------------
# Fused kernel: EEDeltaDecoder + ContactDecoder sharing the x block.
# ---------------------------------------------------------------------------
def _fused_heads_kernel(x_ref, w1_ref, w2e_ref, w3e_ref, w2c_ref,
                        b1_ref, bp_ref, ee_ref, ct_ref, *, alpha, n_ee_h):
    mxu_dt = w1_ref.dtype
    # In-kernel f32 -> bf16 cast of the latent (VPU work hidden under MXU/DMA).
    x = x_ref[...].astype(mxu_dt)

    # Fused first layer: [W1_ee | W1_ct] -> (tile_b, 128 + 256), f32 accumulate.
    h1 = jnp.dot(x, w1_ref[...], preferred_element_type=jnp.float32)
    h1 = _leaky_relu(h1 + b1_ref[...], alpha)
    h_ee = h1[:, :n_ee_h]          # (tile_b, 128)
    h_ct = h1[:, n_ee_h:]          # (tile_b, 256)

    # --- EE-delta branch ---
    h2 = jnp.dot(h_ee.astype(mxu_dt), w2e_ref[...],
                 preferred_element_type=jnp.float32)
    h2 = _leaky_relu(h2 + bp_ref[0:1, :], alpha)
    h3 = jnp.dot(h2.astype(mxu_dt), w3e_ref[...],
                 preferred_element_type=jnp.float32)
    h3 = h3 + bp_ref[1:2, :]
    ee_ref[...] = h3[:, :ee_ref.shape[1]].astype(ee_ref.dtype)

    # --- Contact branch ---
    c = jnp.dot(h_ct.astype(mxu_dt), w2c_ref[...],
                preferred_element_type=jnp.float32)
    c = (c + bp_ref[2:3, :])[:, :ct_ref.shape[1]]
    # sigmoid = 1 / (1 + exp(-x)); divide routed to EUP via approx reciprocal.
    ct_ref[...] = pl.reciprocal(1.0 + jnp.exp(-c), approx=True).astype(ct_ref.dtype)


def _pick_tile_b(batch, max_tile=512):
    """Multiple-of-8 batch tile; >=2 grid steps when batch allows; bounded pad."""
    b8 = _round_up(max(batch, 8), 8)
    if b8 <= 16:
        return b8
    tile = min(max_tile, _round_up(_cdiv(b8, 2), 8))
    k = _cdiv(b8, tile)
    return _round_up(_cdiv(b8, k), 8)


def sensor_fusion_decode_heads(z, ee_params, ct_params, alpha=0.1,
                               max_tile_b=512, mxu_dtype=jnp.bfloat16):
    """z: [batch, z_dim] f32 -> (proprio [batch, ee_dim] f32, contact [batch, 1] f32)."""
    batch, z_dim = z.shape
    n_ee_h = ee_params["w1"].shape[1]           # 128
    n_ct_h = ct_params["w1"].shape[1]           # 256
    ee_dim = ee_params["w3"].shape[1]           # e.g. 5
    ee_w = max(8, _round_up(ee_dim, 8))         # narrow lane count, full-dim block
    ct_w = 8

    # Pack weights: fused first layer + padded (to 128) last layers, bf16 MXU operands.
    w1 = jnp.concatenate([ee_params["w1"], ct_params["w1"]], axis=1).astype(mxu_dtype)
    w2e = ee_params["w2"].astype(mxu_dtype)
    w3e = jnp.pad(ee_params["w3"], ((0, 0), (0, LANE - ee_dim))).astype(mxu_dtype)
    w2c = jnp.pad(ct_params["w2"], ((0, 0), (0, LANE - ct_params["w2"].shape[1]))).astype(mxu_dtype)

    # Biases stay f32; three 128-wide ones packed into a single (3, 128) buffer.
    b1 = jnp.concatenate([ee_params["b1"], ct_params["b1"]], axis=1).astype(jnp.float32)
    bpack = jnp.concatenate([
        ee_params["b2"],
        jnp.pad(ee_params["b3"], ((0, 0), (0, LANE - ee_dim))),
        jnp.pad(ct_params["b2"], ((0, 0), (0, LANE - ct_params["b2"].shape[1]))),
    ], axis=0).astype(jnp.float32)

    # Batch tiling (x stays f32; cast happens inside the kernel).
    tile_b = _pick_tile_b(batch, max_tile_b)
    padded_b = _round_up(batch, tile_b)
    x_c = z if padded_b == batch else jnp.pad(z, ((0, padded_b - batch), (0, 0)))

    resident = lambda a: pl.BlockSpec(a.shape, lambda b: (0,) * a.ndim)

    flops = 2 * padded_b * (z_dim * (n_ee_h + n_ct_h)
                            + n_ee_h * n_ee_h + n_ee_h * LANE + n_ct_h * LANE)
    bytes_accessed = (4 * padded_b * z_dim                       # x in (f32)
                      + 4 * padded_b * (ee_w + ct_w)             # narrow outputs
                      + 2 * (z_dim * (n_ee_h + n_ct_h)
                             + n_ee_h * n_ee_h + n_ee_h * LANE + n_ct_h * LANE)
                      + 4 * ((n_ee_h + n_ct_h) + 3 * LANE))      # biases

    ee_out, ct_out = pl.pallas_call(
        functools.partial(_fused_heads_kernel, alpha=alpha, n_ee_h=n_ee_h),
        out_shape=(jax.ShapeDtypeStruct((padded_b, ee_w), jnp.float32),
                   jax.ShapeDtypeStruct((padded_b, ct_w), jnp.float32)),
        grid=(padded_b // tile_b,),
        in_specs=[pl.BlockSpec((tile_b, z_dim), lambda b: (b, 0)),
                  resident(w1), resident(w2e), resident(w3e), resident(w2c),
                  resident(b1), resident(bpack)],
        out_specs=[pl.BlockSpec((tile_b, ee_w), lambda b: (b, 0)),
                   pl.BlockSpec((tile_b, ct_w), lambda b: (b, 0))],
        compiler_params=pltpu.CompilerParams(
            dimension_semantics=("parallel",)),
        cost_estimate=pl.CostEstimate(
            flops=flops,
            transcendentals=padded_b * ct_w,
            bytes_accessed=bytes_accessed),
    )(x_c, w1, w2e, w3e, w2c, b1, bpack)

    return ee_out[:batch, :ee_dim], ct_out[:batch, :1]


# ---------------------------------------------------------------------------
# Parameter init (matches nn.Linear default: uniform +/- 1/sqrt(fan_in);
# weights stored as [in_features, out_features]).
# ---------------------------------------------------------------------------
def _init_linear(kw, kb, fan_in, fan_out, dtype=jnp.float32):
    bound = 1.0 / math.sqrt(fan_in)
    w = jax.random.uniform(kw, (fan_in, fan_out), dtype, -bound, bound)
    b = jax.random.uniform(kb, (1, fan_out), dtype, -bound, bound)
    return w, b


def init_ee_delta_decoder_params(key, z_dim, ee_dim):
    ks = jax.random.split(key, 6)
    w1, b1 = _init_linear(ks[0], ks[1], z_dim, 128)
    w2, b2 = _init_linear(ks[2], ks[3], 128, 128)
    w3, b3 = _init_linear(ks[4], ks[5], 128, ee_dim)
    return {"w1": w1, "b1": b1, "w2": w2, "b2": b2, "w3": w3, "b3": b3}


def init_contact_decoder_params(key, z_dim):
    ks = jax.random.split(key, 4)
    w1, b1 = _init_linear(ks[0], ks[1], z_dim, 256)
    w2, b2 = _init_linear(ks[2], ks[3], 256, 1)
    return {"w1": w1, "b1": b1, "w2": w2, "b2": b2}


# ---------------------------------------------------------------------------
# Pure-JAX references
# ---------------------------------------------------------------------------
def _ref_ee_delta_decoder(x, p, alpha=0.1, dtype=jnp.float32):
    def mm(a, w):
        return jnp.dot(a.astype(dtype), w.astype(dtype),
                       preferred_element_type=jnp.float32)
    h = mm(x, p["w1"]) + p["b1"]
    h = jnp.where(h > 0, h, alpha * h)
    h = mm(h, p["w2"]) + p["b2"]
    h = jnp.where(h > 0, h, alpha * h)
    return mm(h, p["w3"]) + p["b3"]


def _ref_contact_decoder(x, p, alpha=0.1, dtype=jnp.float32):
    def mm(a, w):
        return jnp.dot(a.astype(dtype), w.astype(dtype),
                       preferred_element_type=jnp.float32)
    h = mm(x, p["w1"]) + p["b1"]
    h = jnp.where(h > 0, h, alpha * h)
    return jax.nn.sigmoid(mm(h, p["w2"]) + p["b2"])


if __name__ == "__main__":
    key = jax.random.PRNGKey(0)
    k_z, k_pp, k_pc = jax.random.split(key, 3)

    # Shapes consistent with SensorFusion defaults: z_dim=128, proprio_dim=5.
    batch, z_dim, proprio_dim, alpha = 8, 128, 5, 0.1

    z = jax.random.normal(k_z, (batch, z_dim), jnp.float32)       # fused latent
    ee_params = init_ee_delta_decoder_params(k_pp, z_dim, proprio_dim)
    ct_params = init_contact_decoder_params(k_pc, z_dim)

    out_proprio, out_contact = sensor_fusion_decode_heads(
        z, ee_params, ct_params, alpha=alpha)
    out_proprio = jax.block_until_ready(out_proprio)
    out_contact = jax.block_until_ready(out_contact)

    assert out_proprio.shape == (batch, proprio_dim)
    assert out_contact.shape == (batch, 1)

    # Tight check against a reference using the same bf16 MXU operands
    # (contact tolerance slightly looser for the approx-reciprocal sigmoid).
    ref_p_bf16 = _ref_ee_delta_decoder(z, ee_params, alpha, dtype=jnp.bfloat16)
    ref_c_bf16 = _ref_contact_decoder(z, ct_params, alpha, dtype=jnp.bfloat16)
    assert jnp.allclose(out_proprio, ref_p_bf16, atol=1e-3, rtol=1e-3), "proprio mismatch (bf16 ref)"
    assert jnp.allclose(out_contact, ref_c_bf16, atol=3e-3, rtol=3e-3), "contact mismatch (bf16 ref)"

    # Loose sanity check against full-f32 module semantics.
    ref_p_f32 = _ref_ee_delta_decoder(z, ee_params, alpha, dtype=jnp.float32)
    ref_c_f32 = _ref_contact_decoder(z, ct_params, alpha, dtype=jnp.float32)
    assert jnp.allclose(out_proprio, ref_p_f32, atol=5e-2, rtol=5e-2), "proprio mismatch (f32 ref)"
    assert jnp.allclose(out_contact, ref_c_f32, atol=5e-2, rtol=5e-2), "contact mismatch (f32 ref)"

    print("KERNEL_OK")
</pallas_src>

<mosaic_0001>
module attributes {stable_mosaic.version = 11 : i64} {
  func.func @_fused_heads_kernel(%arg0: i32, %arg1: memref<8x128xf32, #tpu.memory_space<vmem>>, %arg2: memref<128x384xbf16, #tpu.memory_space<vmem>>, %arg3: memref<128x128xbf16, #tpu.memory_space<vmem>>, %arg4: memref<128x128xbf16, #tpu.memory_space<vmem>>, %arg5: memref<256x128xbf16, #tpu.memory_space<vmem>>, %arg6: memref<1x384xf32, #tpu.memory_space<vmem>>, %arg7: memref<3x128xf32, #tpu.memory_space<vmem>>, %arg8: memref<8x8xf32, #tpu.memory_space<vmem>>, %arg9: memref<8x8xf32, #tpu.memory_space<vmem>>) attributes {dimension_semantics = [#tpu.dimension_semantics<parallel>], iteration_bounds = array<i64: 1>, scalar_prefetch = 0 : i64, scratch_operands = 0 : i64, tpu.core_type = #tpu.core_type<tc>, window_params = [{transform_indices = @transform_0, window_bounds = array<i64: 8, 128>}, {pipeline_mode = #tpu.pipeline_mode<synchronous>, transform_indices = @transform_1, window_bounds = array<i64: 128, 384>}, {pipeline_mode = #tpu.pipeline_mode<synchronous>, transform_indices = @transform_2, window_bounds = array<i64: 128, 128>}, {pipeline_mode = #tpu.pipeline_mode<synchronous>, transform_indices = @transform_3, window_bounds = array<i64: 128, 128>}, {pipeline_mode = #tpu.pipeline_mode<synchronous>, transform_indices = @transform_4, window_bounds = array<i64: 256, 128>}, {pipeline_mode = #tpu.pipeline_mode<synchronous>, transform_indices = @transform_5, window_bounds = array<i64: 1, 384>}, {pipeline_mode = #tpu.pipeline_mode<synchronous>, transform_indices = @transform_6, window_bounds = array<i64: 3, 128>}, {transform_indices = @transform_7, window_bounds = array<i64: 8, 8>}, {transform_indices = @transform_8, window_bounds = array<i64: 8, 8>}]} {
    %c0 = arith.constant 0 : index
    %c0_0 = arith.constant 0 : index
    %0 = vector.load %arg1[%c0, %c0_0] : memref<8x128xf32, #tpu.memory_space<vmem>>, vector<8x128xf32>
    %1 = arith.truncf %0 : vector<8x128xf32> to vector<8x128xbf16>
    %c0_1 = arith.constant 0 : index
    %c0_2 = arith.constant 0 : index
    %2 = vector.load %arg2[%c0_1, %c0_2] : memref<128x384xbf16, #tpu.memory_space<vmem>>, vector<128x384xbf16>
    %cst = arith.constant dense<0.000000e+00> : vector<8x384xf32>
    %3 = tpu.matmul %1, %2, %cst {dimension_numbers = #tpu.dot_dimension_numbers<[1], [0], [0], [1], [0, 0, 1, 1], [], []>} : vector<8x128xbf16>, vector<128x384xbf16>, vector<8x384xf32> -> vector<8x384xf32>
    %c0_3 = arith.constant 0 : index
    %c0_4 = arith.constant 0 : index
    %4 = vector.load %arg6[%c0_3, %c0_4] : memref<1x384xf32, #tpu.memory_space<vmem>>, vector<1x384xf32>
    %5 = vector.broadcast %4 : vector<1x384xf32> to vector<8x384xf32>
    %6 = arith.addf %3, %5 : vector<8x384xf32>
    %cst_5 = arith.constant 0.000000e+00 : f32
    %7 = vector.broadcast %cst_5 : f32 to vector<8x384xf32>
    %8 = arith.cmpf ogt, %6, %7 : vector<8x384xf32>
    %cst_6 = arith.constant 1.000000e-01 : f32
    %9 = vector.broadcast %cst_6 : f32 to vector<8x384xf32>
    %10 = arith.mulf %9, %6 : vector<8x384xf32>
    %11 = arith.select %8, %6, %10 : vector<8x384xi1>, vector<8x384xf32>
    %12 = vector.extract_strided_slice %11 {offsets = [0, 0], sizes = [8, 128], strides = [1, 1]} : vector<8x384xf32> to vector<8x128xf32>
    %13 = vector.extract_strided_slice %11 {offsets = [0, 128], sizes = [8, 256], strides = [1, 1]} : vector<8x384xf32> to vector<8x256xf32>
    %14 = arith.truncf %12 : vector<8x128xf32> to vector<8x128xbf16>
    %c0_7 = arith.constant 0 : index
    %c0_8 = arith.constant 0 : index
    %15 = vector.load %arg3[%c0_7, %c0_8] : memref<128x128xbf16, #tpu.memory_space<vmem>>, vector<128x128xbf16>
    %cst_9 = arith.constant dense<0.000000e+00> : vector<8x128xf32>
    %16 = tpu.matmul %14, %15, %cst_9 {dimension_numbers = #tpu.dot_dimension_numbers<[1], [0], [0], [1], [0, 0, 1, 1], [], []>} : vector<8x128xbf16>, vector<128x128xbf16>, vector<8x128xf32> -> vector<8x128xf32>
    %c0_10 = arith.constant 0 : index
    %c0_11 = arith.constant 0 : index
    %17 = vector.load %arg7[%c0_10, %c0_11] : memref<3x128xf32, #tpu.memory_space<vmem>>, vector<1x128xf32>
    %18 = vector.broadcast %17 : vector<1x128xf32> to vector<8x128xf32>
    %19 = arith.addf %16, %18 : vector<8x128xf32>
    %cst_12 = arith.constant 0.000000e+00 : f32
    %20 = vector.broadcast %cst_12 : f32 to vector<8x128xf32>
    %21 = arith.cmpf ogt, %19, %20 : vector<8x128xf32>
    %cst_13 = arith.constant 1.000000e-01 : f32
    %22 = vector.broadcast %cst_13 : f32 to vector<8x128xf32>
    %23 = arith.mulf %22, %19 : vector<8x128xf32>
    %24 = arith.select %21, %19, %23 : vector<8x128xi1>, vector<8x128xf32>
    %25 = arith.truncf %24 : vector<8x128xf32> to vector<8x128xbf16>
    %c0_14 = arith.constant 0 : index
    %c0_15 = arith.constant 0 : index
    %26 = vector.load %arg4[%c0_14, %c0_15] : memref<128x128xbf16, #tpu.memory_space<vmem>>, vector<128x128xbf16>
    %cst_16 = arith.constant dense<0.000000e+00> : vector<8x128xf32>
    %27 = tpu.matmul %25, %26, %cst_16 {dimension_numbers = #tpu.dot_dimension_numbers<[1], [0], [0], [1], [0, 0, 1, 1], [], []>} : vector<8x128xbf16>, vector<128x128xbf16>, vector<8x128xf32> -> vector<8x128xf32>
    %c1 = arith.constant 1 : index
    %c0_17 = arith.constant 0 : index
    %28 = vector.load %arg7[%c1, %c0_17] : memref<3x128xf32, #tpu.memory_space<vmem>>, vector<1x128xf32>
    %29 = vector.broadcast %28 : vector<1x128xf32> to vector<8x128xf32>
    %30 = arith.addf %27, %29 : vector<8x128xf32>
    %31 = vector.extract_strided_slice %30 {offsets = [0, 0], sizes = [8, 8], strides = [1, 1]} : vector<8x128xf32> to vector<8x8xf32>
    %c0_18 = arith.constant 0 : index
    %c0_19 = arith.constant 0 : index
    %32 = vector.load %arg8[%c0_18, %c0_19] : memref<8x8xf32, #tpu.memory_space<vmem>>, vector<8x8xf32>
    tpu.vector_store %arg8[%c0_18, %c0_19], %31 {strides = array<i32>} : memref<8x8xf32, #tpu.memory_space<vmem>>, vector<8x8xf32>,
    %33 = arith.truncf %13 : vector<8x256xf32> to vector<8x256xbf16>
    %c0_20 = arith.constant 0 : index
    %c0_21 = arith.constant 0 : index
    %34 = vector.load %arg5[%c0_20, %c0_21] : memref<256x128xbf16, #tpu.memory_space<vmem>>, vector<256x128xbf16>
    %cst_22 = arith.constant dense<0.000000e+00> : vector<8x128xf32>
    %35 = tpu.matmul %33, %34, %cst_22 {dimension_numbers = #tpu.dot_dimension_numbers<[1], [0], [0], [1], [0, 0, 1, 1], [], []>} : vector<8x256xbf16>, vector<256x128xbf16>, vector<8x128xf32> -> vector<8x128xf32>
    %c2 = arith.constant 2 : index
    %c0_23 = arith.constant 0 : index
    %36 = vector.load %arg7[%c2, %c0_23] : memref<3x128xf32, #tpu.memory_space<vmem>>, vector<1x128xf32>
    %37 = vector.broadcast %36 : vector<1x128xf32> to vector<8x128xf32>
    %38 = arith.addf %35, %37 : vector<8x128xf32>
    %39 = vector.extract_strided_slice %38 {offsets = [0, 0], sizes = [8, 8], strides = [1, 1]} : vector<8x128xf32> to vector<8x8xf32>
    %cst_24 = arith.constant 0.000000e+00 : f32
    %40 = vector.broadcast %cst_24 : f32 to vector<8x8xf32>
    %41 = arith.subf %40, %39 : vector<8x8xf32>
    %42 = math.exp %41 : vector<8x8xf32>
    %cst_25 = arith.constant 1.000000e+00 : f32
    %43 = vector.broadcast %cst_25 : f32 to vector<8x8xf32>
    %44 = arith.addf %43, %42 : vector<8x8xf32>
    %45 = tpu.reciprocal %44 {approx = true} : vector<8x8xf32> -> vector<8x8xf32>
    %c0_26 = arith.constant 0 : index
    %c0_27 = arith.constant 0 : index
    %46 = vector.load %arg9[%c0_26, %c0_27] : memref<8x8xf32, #tpu.memory_space<vmem>>, vector<8x8xf32>
    tpu.vector_store %arg9[%c0_26, %c0_27], %45 {strides = array<i32>} : memref<8x8xf32, #tpu.memory_space<vmem>>, vector<8x8xf32>,
    return
  }
  func.func @transform_0(%arg0: i32) -> (i32, i32) {
    %c0_i32 = arith.constant 0 : i32
    %c0_i32_0 = arith.constant 0 : i32
    return %arg0, %c0_i32 : i32, i32
  }
  func.func @transform_1(%arg0: i32) -> (i32, i32) {
    %c0_i32 = arith.constant 0 : i32
    %c0_i32_0 = arith.constant 0 : i32
    %c0_i32_1 = arith.constant 0 : i32
    return %c0_i32, %c0_i32_0 : i32, i32
  }
  func.func @transform_2(%arg0: i32) -> (i32, i32) {
    %c0_i32 = arith.constant 0 : i32
    %c0_i32_0 = arith.constant 0 : i32
    %c0_i32_1 = arith.constant 0 : i32
    return %c0_i32, %c0_i32_0 : i32, i32
  }
  func.func @transform_3(%arg0: i32) -> (i32, i32) {
    %c0_i32 = arith.constant 0 : i32
    %c0_i32_0 = arith.constant 0 : i32
    %c0_i32_1 = arith.constant 0 : i32
    return %c0_i32, %c0_i32_0 : i32, i32
  }
  func.func @transform_4(%arg0: i32) -> (i32, i32) {
    %c0_i32 = arith.constant 0 : i32
    %c0_i32_0 = arith.constant 0 : i32
    %c0_i32_1 = arith.constant 0 : i32
    return %c0_i32, %c0_i32_0 : i32, i32
  }
  func.func @transform_5(%arg0: i32) -> (i32, i32) {
    %c0_i32 = arith.constant 0 : i32
    %c0_i32_0 = arith.constant 0 : i32
    %c0_i32_1 = arith.constant 0 : i32
    return %c0_i32, %c0_i32_0 : i32, i32
  }
  func.func @transform_6(%arg0: i32) -> (i32, i32) {
    %c0_i32 = arith.constant 0 : i32
    %c0_i32_0 = arith.constant 0 : i32
    %c0_i32_1 = arith.constant 0 : i32
    return %c0_i32, %c0_i32_0 : i32, i32
  }
  func.func @transform_7(%arg0: i32) -> (i32, i32) {
    %c0_i32 = arith.constant 0 : i32
    %c0_i32_0 = arith.constant 0 : i32
    return %arg0, %c0_i32 : i32, i32
  }
  func.func @transform_8(%arg0: i32) -> (i32, i32) {
    %c0_i32 = arith.constant 0 : i32
    %c0_i32_0 = arith.constant 0 : i32
    return %arg0, %c0_i32 : i32, i32
  }
}

</mosaic_0001>

<llo_original>
// kernel: tpu_custom_call.1
$region0: #{tpu_custom_call.1}
  #allocation0 [shape = 'u32[]', space=smem, size = 0x4, offset = 0x4, fixed_abs, tag = 'smem constant byte address 0x4 - core index']
  #allocation1 [shape = 'u32[72,128]{1,0:T(1,128)}', space=vmem, size = 0x9000, scoped, tag = 'internal scratch']
  %s0 = inlined_call_operand.hbm [shape: f32[8,128], index: 0, kind: input, shape index: {}]
  %s1 = inlined_call_operand.hbm [shape: bf16[128,384], index: 1, kind: input, shape index: {}]
  %s2 = inlined_call_operand.hbm [shape: bf16[128,128], index: 2, kind: input, shape index: {}]
  %s3 = inlined_call_operand.hbm [shape: bf16[128,128], index: 3, kind: input, shape index: {}]
  %s4 = inlined_call_operand.hbm [shape: bf16[256,128], index: 4, kind: input, shape index: {}]
  %s5 = inlined_call_operand.hbm [shape: f32[1,384], index: 5, kind: input, shape index: {}]
  %s6 = inlined_call_operand.vmem [shape: f32[3,128], index: 6, kind: input, shape index: {}]
  %s7 = inlined_call_operand.hbm [shape: f32[8,8], index: 7, kind: output, shape index: {0}]
  %s8 = inlined_call_operand.hbm [shape: f32[8,8], index: 8, kind: output, shape index: {1}]
  %9 = xla_tuple %s7, %s8
  %s10 = sld [smem:[#allocation0]]
  $region70: #{tpu_custom_call.1} parent=0
    _
  %s12 = ssub.s32 1, %s10
  %s13 = scalar_select 0, %s12, %s10
  $region1: #{tpu_custom_call.1} parent=0
    #allocation2 [shape = 'u8[4096]{0}', space=vmem, size = 0x1000, scoped, tag = 'input window, operand 0, single buffered']
    #allocation3 [shape = 's32[1]{0}', space=sflag, size = 0x4, scoped, tag = 'scoped memory for tpu_custom_call.1']
    #allocation4 [shape = 's32[1]{0}', space=sflag, size = 0x4, scoped, tag = 'scoped memory for tpu_custom_call.1']
    #allocation5 [shape = 'u8[98304]{0}', space=vmem, size = 0x18000, scoped, tag = 'input window, operand 1, single buffered']
    #allocation6 [shape = 's32[1]{0}', space=sflag, size = 0x4, scoped, tag = 'scoped memory for tpu_custom_call.1']
    #allocation7 [shape = 'u8[32768]{0}', space=vmem, size = 0x8000, scoped, tag = 'input window, operand 2, single buffered']
    #allocation8 [shape = 'u8[32768]{0}', space=vmem, size = 0x8000, scoped, tag = 'input window, operand 3, single buffered']
    #allocation9 [shape = 's32[1]{0}', space=sflag, size = 0x4, scoped, tag = 'scoped memory for tpu_custom_call.1']
    #allocation10 [shape = 'u8[65536]{0}', space=vmem, size = 0x10000, scoped, tag = 'input window, operand 4, single buffered']
    #allocation11 [shape = 'u8[1536]{0}', space=vmem, size = 0x800, scoped, tag = 'input window, operand 5, single buffered']
    #allocation12 [shape = 's32[1]{0}', space=sflag, size = 0x4, scoped, tag = 'scoped memory for tpu_custom_call.1']
    #allocation13 [shape = 'u8[4096]{0}', space=vmem, size = 0x1000, scoped, tag = 'output window, operand 0, single buffered']
    #allocation14 [shape = 'u8[4096]{0}', space=vmem, size = 0x1000, scoped, tag = 'output window, operand 1, single buffered']
    #allocation15 [shape = 's32[1]{0}', space=sflag, size = 0x4, scoped, tag = 'scoped memory for tpu_custom_call.1']
    %14 = vsyncpa [#allocation3], 0
    %15 = vsyncpa [#allocation6], 0
    %16 = vsyncpa [#allocation9], 0
    %17 = vsyncpa [#allocation12], 0
    %18 = vsyncpa [#allocation4], 0
    %19 = vsyncpa [#allocation15], 0
    // Predicated region
    $region2: #{tpu_custom_call.1} parent=1 // pred_check
      _
    $region3: #{tpu_custom_call.1} parent=1 // pred_check_branch
      %21 = sbr.rel (0) target = $region5
    $region4: #{tpu_custom_call.1} parent=1 // pred_region
      %23 = vsyncadd [#allocation3], 0
      %s25 = sshll.u32 %s0, 4
      %s26 = int_to_ptr.hbm [resolvable:$true] %s25
      %s27 = sshll.u32 [#allocation2], 4
      %s28 = int_to_ptr.vmem [resolvable:$true] %s27
      %30 = dma.hbm_to_vmem [thread:$0]  %s26, 128, %s28, [#allocation3]
    $region5: #{tpu_custom_call.1} parent=1 // pred_fallthru
      _
    // Predicated region
    $region6: #{tpu_custom_call.1} parent=1 // pred_check
      _
    $region7: #{tpu_custom_call.1} parent=1 // pred_check_branch
      %32 = sbr.rel (0) target = $region9
    $region8: #{tpu_custom_call.1} parent=1 // pred_region
      %34 = vsyncadd [#allocation6], 0
      %s35 = sshll.u32 %s1, 4
      %s36 = int_to_ptr.hbm [resolvable:$true] %s35
      %s37 = sshll.u32 [#allocation5], 4
      %s38 = int_to_ptr.vmem [resolvable:$true] %s37
      %43 = dma.hbm_to_vmem [thread:$0]  %s36, 3072, %s38, [#allocation6], 192, 192, 12
    $region9: #{tpu_custom_call.1} parent=1 // pred_fallthru
      _
    // Predicated region
    $region10: #{tpu_custom_call.1} parent=1 // pred_check
      _
    $region11: #{tpu_custom_call.1} parent=1 // pred_check_branch
      %45 = sbr.rel (0) target = $region13
    $region12: #{tpu_custom_call.1} parent=1 // pred_region
      %47 = vsyncadd [#allocation6], 0
      %s48 = sshll.u32 %s2, 4
      %s49 = int_to_ptr.hbm [resolvable:$true] %s48
      %s50 = sshll.u32 [#allocation7], 4
      %s51 = int_to_ptr.vmem [resolvable:$true] %s50
      %56 = dma.hbm_to_vmem [thread:$0]  %s49, 1024, %s51, [#allocation6], 64, 64, 4
    $region13: #{tpu_custom_call.1} parent=1 // pred_fallthru
      _
    // Predicated region
    $region14: #{tpu_custom_call.1} parent=1 // pred_check
      _
    $region15: #{tpu_custom_call.1} parent=1 // pred_check_branch
      %58 = sbr.rel (0) target = $region17
    $region16: #{tpu_custom_call.1} parent=1 // pred_region
      %60 = vsyncadd [#allocation9], 0
      %s61 = sshll.u32 %s3, 4
      %s62 = int_to_ptr.hbm [resolvable:$true] %s61
      %s63 = sshll.u32 [#allocation8], 4
      %s64 = int_to_ptr.vmem [resolvable:$true] %s63
      %69 = dma.hbm_to_vmem [thread:$0]  %s62, 1024, %s64, [#allocation9], 64, 64, 4
    $region17: #{tpu_custom_call.1} parent=1 // pred_fallthru
      _
    // Predicated region
    $region18: #{tpu_custom_call.1} parent=1 // pred_check
      _
    $region19: #{tpu_custom_call.1} parent=1 // pred_check_branch
      %71 = sbr.rel (0) target = $region21
    $region20: #{tpu_custom_call.1} parent=1 // pred_region
      %73 = vsyncadd [#allocation9], 0
      %s74 = sshll.u32 %s4, 4
      %s75 = int_to_ptr.hbm [resolvable:$true] %s74
      %s76 = sshll.u32 [#allocation10], 4
      %s77 = int_to_ptr.vmem [resolvable:$true] %s76
      %82 = dma.hbm_to_vmem [thread:$0]  %s75, 2048, %s77, [#allocation9], 64, 64, 4
    $region21: #{tpu_custom_call.1} parent=1 // pred_fallthru
      _
    // Predicated region
    $region22: #{tpu_custom_call.1} parent=1 // pred_check
      _
    $region23: #{tpu_custom_call.1} parent=1 // pred_check_branch
      %84 = sbr.rel (0) target = $region25
    $region24: #{tpu_custom_call.1} parent=1 // pred_region
      %86 = vsyncadd [#allocation12], 0
      %s88 = sshll.u32 %s5, 4
      %s89 = int_to_ptr.hbm [resolvable:$true] %s88
      %s90 = sshll.u32 [#allocation11], 4
      %s91 = int_to_ptr.vmem [resolvable:$true] %s90
      %93 = dma.hbm_to_vmem [thread:$0]  %s89, 48, %s91, [#allocation12]
    $region25: #{tpu_custom_call.1} parent=1 // pred_fallthru
      _
    // Predicated region
    $region26: #{tpu_custom_call.1} parent=1 // pred_check
      _
    $region27: #{tpu_custom_call.1} parent=1 // pred_check_branch
      %95 = sbr.rel (0) target = $region29
    $region28: #{tpu_custom_call.1} parent=1 // pred_region
      _
    $region29: #{tpu_custom_call.1} parent=1 // pred_fallthru
      _
    // Predicated region
    $region30: #{tpu_custom_call.1} parent=1 // pred_check
      _
    $region31: #{tpu_custom_call.1} parent=1 // pred_check_branch
      %97 = sbr.rel (0) target = $region33
    $region32: #{tpu_custom_call.1} parent=1 // pred_region
      %99 = dma.done [#allocation3], 128
    $region33: #{tpu_custom_call.1} parent=1 // pred_fallthru
      _
    // Predicated region
    $region34: #{tpu_custom_call.1} parent=1 // pred_check
      _
    $region35: #{tpu_custom_call.1} parent=1 // pred_check_branch
      %101 = sbr.rel (0) target = $region37
    $region36: #{tpu_custom_call.1} parent=1 // pred_region
      %103 = dma.done [#allocation6], 3072
    $region37: #{tpu_custom_call.1} parent=1 // pred_fallthru
      _
    // Predicated region
    $region38: #{tpu_custom_call.1} parent=1 // pred_check
      _
    $region39: #{tpu_custom_call.1} parent=1 // pred_check_branch
      %105 = sbr.rel (0) target = $region41
    $region40: #{tpu_custom_call.1} parent=1 // pred_region
      %107 = dma.done [#allocation6], 1024
    $region41: #{tpu_custom_call.1} parent=1 // pred_fallthru
      _
    // Predicated region
    $region42: #{tpu_custom_call.1} parent=1 // pred_check
      _
    $region43: #{tpu_custom_call.1} parent=1 // pred_check_branch
      %109 = sbr.rel (0) target = $region45
    $region44: #{tpu_custom_call.1} parent=1 // pred_region
      %111 = dma.done [#allocation9], 1024
    $region45: #{tpu_custom_call.1} parent=1 // pred_fallthru
      _
    // Predicated region
    $region46: #{tpu_custom_call.1} parent=1 // pred_check
      _
    $region47: #{tpu_custom_call.1} parent=1 // pred_check_branch
      %113 = sbr.rel (0) target = $region49
    $region48: #{tpu_custom_call.1} parent=1 // pred_region
      %115 = dma.done [#allocation9], 2048
    $region49: #{tpu_custom_call.1} parent=1 // pred_fallthru
      _
    // Predicated region
    $region50: #{tpu_custom_call.1} parent=1 // pred_check
      _
    $region51: #{tpu_custom_call.1} parent=1 // pred_check_branch
      %117 = sbr.rel (0) target = $region53
    $region52: #{tpu_custom_call.1} parent=1 // pred_region
      %119 = dma.done [#allocation12], 48
    $region53: #{tpu_custom_call.1} parent=1 // pred_fallthru
      _
    %v120 = vld [vmem:[#allocation2] sm:$0xff]
    %v121 = vpack.c.bf16 %v120, %v120
    %v122 = vld [vmem:[#allocation5] sm:$0xff]
    %v123 = vld [vmem:[#allocation5 + $0x8] sm:$0xf]
    %v124 = vld [vmem:[#allocation5 + $0xc] sm:$0xff]
    %v125 = vld [vmem:[#allocation5 + $0x14] sm:$0xf]
    %v126 = vld [vmem:[#allocation5 + $0x18] sm:$0xff]
    %v127 = vld [vmem:[#allocation5 + $0x20] sm:$0xf]
    %v128 = vld [vmem:[#allocation5 + $0x24] sm:$0xff]
    %v129 = vld [vmem:[#allocation5 + $0x2c] sm:$0xf]
    %v130 = vld [vmem:[#allocation5 + $0x30] sm:$0xff]
    %v131 = vld [vmem:[#allocation5 + $0x38] sm:$0xf]
    %v132 = vld [vmem:[#allocation5 + $0x3c] sm:$0xff]
    %v133 = vld [vmem:[#allocation5 + $0x44] sm:$0xf]
    %v134 = vld [vmem:[#allocation5 + $0x48] sm:$0xff]
    %v135 = vld [vmem:[#allocation5 + $0x50] sm:$0xf]
    %v136 = vld [vmem:[#allocation5 + $0x54] sm:$0xff]
    %v137 = vld [vmem:[#allocation5 + $0x5c] sm:$0xf]
    %v138 = vld [vmem:[#allocation5 + $0x60] sm:$0xff]
    %v139 = vld [vmem:[#allocation5 + $0x68] sm:$0xf]
    %v140 = vld [vmem:[#allocation5 + $0x6c] sm:$0xff]
    %v141 = vld [vmem:[#allocation5 + $0x74] sm:$0xf]
    %v142 = vld [vmem:[#allocation5 + $0x78] sm:$0xff]
    %v143 = vld [vmem:[#allocation5 + $0x80] sm:$0xf]
    %v144 = vld [vmem:[#allocation5 + $0x84] sm:$0xff]
    %v145 = vld [vmem:[#allocation5 + $0x8c] sm:$0xf]
    %v146 = vld [vmem:[#allocation5 + $0x90] sm:$0xff]
    %v147 = vld [vmem:[#allocation5 + $0x98] sm:$0xf]
    %v148 = vld [vmem:[#allocation5 + $0x9c] sm:$0xff]
    %v149 = vld [vmem:[#allocation5 + $0xa4] sm:$0xf]
    %v150 = vld [vmem:[#allocation5 + $0xa8] sm:$0xff]
    %v151 = vld [vmem:[#allocation5 + $0xb0] sm:$0xf]
    %v152 = vld [vmem:[#allocation5 + $0xb4] sm:$0xff]
    %v153 = vld [vmem:[#allocation5 + $0xbc] sm:$0xf]
    %v154 = vld [vmem:[#allocation11] sm:$0x7]
    %v156 = vperm.slane %v154, 0
    %v157 = vperm.slane %v154, 1
    %v158 = vperm.slane %v154, 2
    %v194 = vunpack.c.l.b16 %v122
    %v195 = vunpack.c.h.b16 %v122
    %v196 = vunpack.c.l.b16 %v123
    %v197 = vunpack.c.l.b16 %v124
    %v198 = vunpack.c.h.b16 %v124
    %v199 = vunpack.c.l.b16 %v125
    %v200 = vunpack.c.l.b16 %v126
    %v201 = vunpack.c.h.b16 %v126
    %v202 = vunpack.c.l.b16 %v127
    %v203 = vunpack.c.l.b16 %v128
    %v204 = vunpack.c.h.b16 %v128
    %v205 = vunpack.c.l.b16 %v129
    %v206 = vunpack.c.l.b16 %v130
    %v207 = vunpack.c.h.b16 %v130
    %v208 = vunpack.c.l.b16 %v131
    %v209 = vunpack.c.l.b16 %v132
    %v210 = vunpack.c.h.b16 %v132
    %v211 = vunpack.c.l.b16 %v133
    %v212 = vunpack.c.l.b16 %v134
    %v213 = vunpack.c.h.b16 %v134
    %v214 = vunpack.c.l.b16 %v135
    %v215 = vunpack.c.l.b16 %v136
    %v216 = vunpack.c.h.b16 %v136
    %v217 = vunpack.c.l.b16 %v137
    %v218 = vunpack.c.l.b16 %v138
    %v219 = vunpack.c.h.b16 %v138
    %v220 = vunpack.c.l.b16 %v139
    %v221 = vunpack.c.l.b16 %v140
    %v222 = vunpack.c.h.b16 %v140
    %v223 = vunpack.c.l.b16 %v141
    %v224 = vunpack.c.l.b16 %v142
    %v225 = vunpack.c.h.b16 %v142
    %v226 = vunpack.c.l.b16 %v143
    %v227 = vunpack.c.l.b16 %v144
    %v228 = vunpack.c.h.b16 %v144
    %v229 = vunpack.c.l.b16 %v145
    %v230 = vunpack.c.l.b16 %v146
    %v231 = vunpack.c.h.b16 %v146
    %v232 = vunpack.c.l.b16 %v147
    %v233 = vunpack.c.l.b16 %v148
    %v234 = vunpack.c.h.b16 %v148
    %v235 = vunpack.c.l.b16 %v149
    %v236 = vunpack.c.l.b16 %v150
    %v237 = vunpack.c.h.b16 %v150
    %v238 = vunpack.c.l.b16 %v151
    %v239 = vunpack.c.l.b16 %v152
    %v240 = vunpack.c.h.b16 %v152
    %v241 = vunpack.c.l.b16 %v153
    %v242 = vpack.c.b16 %v197, %v194
    %v243 = vpack.c.b16 %v198, %v195
    %v244 = vpack.c.b16 %v199, %v196
    %v245 = vpack.c.b16 %v203, %v200
    %v246 = vpack.c.b16 %v204, %v201
    %v247 = vpack.c.b16 %v205, %v202
    %v248 = vpack.c.b16 %v209, %v206
    %v249 = vpack.c.b16 %v210, %v207
    %v250 = vpack.c.b16 %v211, %v208
    %v251 = vpack.c.b16 %v215, %v212
    %v252 = vpack.c.b16 %v216, %v213
    %v253 = vpack.c.b16 %v217, %v214
    %v254 = vpack.c.b16 %v221, %v218
    %v255 = vpack.c.b16 %v222, %v219
    %v256 = vpack.c.b16 %v223, %v220
    %v257 = vpack.c.b16 %v227, %v224
    %v258 = vpack.c.b16 %v228, %v225
    %v259 = vpack.c.b16 %v229, %v226
    %v260 = vpack.c.b16 %v233, %v230
    %v261 = vpack.c.b16 %v234, %v231
    %v262 = vpack.c.b16 %v235, %v232
    %v263 = vpack.c.b16 %v239, %v236
    %v264 = vpack.c.b16 %v240, %v237
    %v265 = vpack.c.b16 %v241, %v238
    %290 = vmatpush.bf16.msra.mxu0 %v263
    %291 = vmatpush.bf16.msra.mxu0 %v260
    %292 = vmatpush.bf16.msra.mxu0 %v257
    %293 = vmatpush.bf16.msra.mxu0 %v254
    %294 = vmatpush.bf16.msra.mxu0 %v251
    %295 = vmatpush.bf16.msra.mxu0 %v248
    %296 = vmatpush.bf16.msra.mxu0 %v245
    %297 = vmatpush.bf16.msra.mxu0 %v242
    %298 = vmatmul.bf16.gmra.mxu0 %v121
    %v299 = vpop.f32.mrf.mxu0
    %v300 = vadd.f32 %v156, %v299
    %v301 = vpop.f32.mrf.mxu0
    %302 = vdwg.mxu0
    %303 = vmatpush.bf16.msra.mxu0 %v264
    %304 = vmatpush.bf16.msra.mxu0 %v261
    %305 = vmatpush.bf16.msra.mxu0 %v258
    %306 = vmatpush.bf16.msra.mxu0 %v255
    %307 = vmatpush.bf16.msra.mxu0 %v252
    %308 = vmatpush.bf16.msra.mxu0 %v249
    %309 = vmatpush.bf16.msra.mxu0 %v246
    %310 = vmatpush.bf16.msra.mxu0 %v243
    %311 = vmatmul.bf16.gmra.mxu0 %v121
    %v312 = vpop.f32.mrf.mxu0
    %v313 = vadd.f32 %v157, %v312
    %v314 = vpop.f32.mrf.mxu0
    %315 = vdwg.mxu0
    %316 = vmatpush.bf16.msra.mxu0 %v265
    %317 = vmatpush.bf16.msra.mxu0 %v262
    %318 = vmatpush.bf16.msra.mxu0 %v259
    %319 = vmatpush.bf16.msra.mxu0 %v256
    %320 = vmatpush.bf16.msra.mxu0 %v253
    %321 = vmatpush.bf16.msra.mxu0 %v250
    %322 = vmatpush.bf16.msra.mxu0 %v247
    %323 = vmatpush.bf16.msra.mxu0 %v244
    %324 = vmatmul.bf16.gmra.mxu0 %v121
    %v325 = vpop.f32.mrf.mxu0
    %v326 = vadd.f32 %v158, %v325
    %v327 = vpop.f32.mrf.mxu0
    %328 = vdwg.mxu0
    %vm329 = vcmp.gt.f32.partialorder %v300, 0.0
    %vm330 = vcmp.gt.f32.partialorder %v313, 0.0
    %vm331 = vcmp.gt.f32.partialorder %v326, 0.0
    %v332 = vmul.f32 %v300, 0.1
    %v333 = vmul.f32 %v313, 0.1
    %v334 = vmul.f32 %v326, 0.1
    %v335 = vsel %vm329, %v300, %v332
    %v336 = vsel %vm330, %v313, %v333
    %v337 = vsel %vm331, %v326, %v334
    %v338 = vpack.c.bf16 %v335, %v335
    %v339 = vld [vmem:[#allocation7] sm:$0xf]
    %v340 = vld [vmem:[#allocation7 + $0x4] sm:$0xf]
    %v341 = vld [vmem:[#allocation7 + $0x8] sm:$0xf]
    %v342 = vld [vmem:[#allocation7 + $0xc] sm:$0xf]
    %v343 = vld [vmem:[#allocation7 + $0x10] sm:$0xf]
    %v344 = vld [vmem:[#allocation7 + $0x14] sm:$0xf]
    %v345 = vld [vmem:[#allocation7 + $0x18] sm:$0xf]
    %v346 = vld [vmem:[#allocation7 + $0x1c] sm:$0xf]
    %v347 = vld [vmem:[#allocation7 + $0x20] sm:$0xf]
    %v348 = vld [vmem:[#allocation7 + $0x24] sm:$0xf]
    %v349 = vld [vmem:[#allocation7 + $0x28] sm:$0xf]
    %v350 = vld [vmem:[#allocation7 + $0x2c] sm:$0xf]
    %v351 = vld [vmem:[#allocation7 + $0x30] sm:$0xf]
    %v352 = vld [vmem:[#allocation7 + $0x34] sm:$0xf]
    %v353 = vld [vmem:[#allocation7 + $0x38] sm:$0xf]
    %v354 = vld [vmem:[#allocation7 + $0x3c] sm:$0xf]
    %v355 = vld [vmem:[%s6] sm:$0x1]
    %v356 = vperm.slane %v355, 0
    %v373 = vunpack.c.l.b16 %v339
    %v374 = vunpack.c.l.b16 %v340
    %v375 = vunpack.c.l.b16 %v341
    %v376 = vunpack.c.l.b16 %v342
    %v377 = vunpack.c.l.b16 %v343
    %v378 = vunpack.c.l.b16 %v344
    %v379 = vunpack.c.l.b16 %v345
    %v380 = vunpack.c.l.b16 %v346
    %v381 = vunpack.c.l.b16 %v347
    %v382 = vunpack.c.l.b16 %v348
    %v383 = vunpack.c.l.b16 %v349
    %v384 = vunpack.c.l.b16 %v350
    %v385 = vunpack.c.l.b16 %v351
    %v386 = vunpack.c.l.b16 %v352
    %v387 = vunpack.c.l.b16 %v353
    %v388 = vunpack.c.l.b16 %v354
    %v389 = vpack.c.b16 %v374, %v373
    %v390 = vpack.c.b16 %v376, %v375
    %v391 = vpack.c.b16 %v378, %v377
    %v392 = vpack.c.b16 %v380, %v379
    %v393 = vpack.c.b16 %v382, %v381
    %v394 = vpack.c.b16 %v384, %v383
    %v395 = vpack.c.b16 %v386, %v385
    %v396 = vpack.c.b16 %v388, %v387
    %405 = vmatpush.bf16.msra.mxu0 %v396
    %406 = vmatpush.bf16.msra.mxu0 %v395
    %407 = vmatpush.bf16.msra.mxu0 %v394
    %408 = vmatpush.bf16.msra.mxu0 %v393
    %409 = vmatpush.bf16.msra.mxu0 %v392
    %410 = vmatpush.bf16.msra.mxu0 %v391
    %411 = vmatpush.bf16.msra.mxu0 %v390
    %412 = vmatpush.bf16.msra.mxu0 %v389
    %413 = vmatmul.bf16.gmra.mxu0 %v338
    %v414 = vpop.f32.mrf.mxu0
    %v415 = vadd.f32 %v356, %v414
    %v416 = vpop.f32.mrf.mxu0
    %417 = vdwg.mxu0
    %vm418 = vcmp.gt.f32.partialorder %v415, 0.0
    %v419 = vmul.f32 %v415, 0.1
    %v420 = vsel %vm418, %v415, %v419
    %v421 = vpack.c.bf16 %v420, %v420
    %v422 = vld [vmem:[#allocation8] sm:$0xf]
    %v423 = vld [vmem:[#allocation8 + $0x4] sm:$0xf]
    %v424 = vld [vmem:[#allocation8 + $0x8] sm:$0xf]
    %v425 = vld [vmem:[#allocation8 + $0xc] sm:$0xf]
    %v426 = vld [vmem:[#allocation8 + $0x10] sm:$0xf]
    %v427 = vld [vmem:[#allocation8 + $0x14] sm:$0xf]
    %v428 = vld [vmem:[#allocation8 + $0x18] sm:$0xf]
    %v429 = vld [vmem:[#allocation8 + $0x1c] sm:$0xf]
    %v430 = vld [vmem:[#allocation8 + $0x20] sm:$0xf]
    %v431 = vld [vmem:[#allocation8 + $0x24] sm:$0xf]
    %v432 = vld [vmem:[#allocation8 + $0x28] sm:$0xf]
    %v433 = vld [vmem:[#allocation8 + $0x2c] sm:$0xf]
    %v434 = vld [vmem:[#allocation8 + $0x30] sm:$0xf]
    %v435 = vld [vmem:[#allocation8 + $0x34] sm:$0xf]
    %v436 = vld [vmem:[#allocation8 + $0x38] sm:$0xf]
    %v437 = vld [vmem:[#allocation8 + $0x3c] sm:$0xf]
    %v438 = vld [vmem:[%s6 + $0x1] sm:$0x1]
    %v439 = vperm.slane %v438, 0
    %v456 = vunpack.c.l.b16 %v422
    %v457 = vunpack.c.l.b16 %v423
    %v458 = vunpack.c.l.b16 %v424
    %v459 = vunpack.c.l.b16 %v425
    %v460 = vunpack.c.l.b16 %v426
    %v461 = vunpack.c.l.b16 %v427
    %v462 = vunpack.c.l.b16 %v428
    %v463 = vunpack.c.l.b16 %v429
    %v464 = vunpack.c.l.b16 %v430
    %v465 = vunpack.c.l.b16 %v431
    %v466 = vunpack.c.l.b16 %v432
    %v467 = vunpack.c.l.b16 %v433
    %v468 = vunpack.c.l.b16 %v434
    %v469 = vunpack.c.l.b16 %v435
    %v470 = vunpack.c.l.b16 %v436
    %v471 = vunpack.c.l.b16 %v437
    %v472 = vpack.c.b16 %v457, %v456
    %v473 = vpack.c.b16 %v459, %v458
    %v474 = vpack.c.b16 %v461, %v460
    %v475 = vpack.c.b16 %v463, %v462
    %v476 = vpack.c.b16 %v465, %v464
    %v477 = vpack.c.b16 %v467, %v466
    %v478 = vpack.c.b16 %v469, %v468
    %v479 = vpack.c.b16 %v471, %v470
    %488 = vmatpush.bf16.msra.mxu0 %v479
    %489 = vmatpush.bf16.msra.mxu0 %v478
    %490 = vmatpush.bf16.msra.mxu0 %v477
    %491 = vmatpush.bf16.msra.mxu0 %v476
    %492 = vmatpush.bf16.msra.mxu0 %v475
    %493 = vmatpush.bf16.msra.mxu0 %v474
    %494 = vmatpush.bf16.msra.mxu0 %v473
    %495 = vmatpush.bf16.msra.mxu0 %v472
    %496 = vmatmul.bf16.gmra.mxu0 %v421
    %v497 = vpop.f32.mrf.mxu0
    %v498 = vadd.f32 %v439, %v497
    %v499 = vpop.f32.mrf.mxu0
    %500 = vdwg.mxu0
    %vm501 = vcmask 64512
    %502 = vst.msk [vmem:[#allocation13] sm:$0xff] %vm501, %v498
    %v503 = vpack.c.bf16 %v336, %v336
    %v504 = vpack.c.bf16 %v337, %v337
    %v505 = vld [vmem:[#allocation10] sm:$0xf]
    %v506 = vld [vmem:[#allocation10 + $0x4] sm:$0xf]
    %v507 = vld [vmem:[#allocation10 + $0x8] sm:$0xf]
    %v508 = vld [vmem:[#allocation10 + $0xc] sm:$0xf]
    %v509 = vld [vmem:[#allocation10 + $0x10] sm:$0xf]
    %v510 = vld [vmem:[#allocation10 + $0x14] sm:$0xf]
    %v511 = vld [vmem:[#allocation10 + $0x18] sm:$0xf]
    %v512 = vld [vmem:[#allocation10 + $0x1c] sm:$0xf]
    %v513 = vld [vmem:[#allocation10 + $0x20] sm:$0xf]
    %v514 = vld [vmem:[#allocation10 + $0x24] sm:$0xf]
    %v515 = vld [vmem:[#allocation10 + $0x28] sm:$0xf]
    %v516 = vld [vmem:[#allocation10 + $0x2c] sm:$0xf]
    %v517 = vld [vmem:[#allocation10 + $0x30] sm:$0xf]
    %v518 = vld [vmem:[#allocation10 + $0x34] sm:$0xf]
    %v519 = vld [vmem:[#allocation10 + $0x38] sm:$0xf]
    %v520 = vld [vmem:[#allocation10 + $0x3c] sm:$0xf]
    %v521 = vld [vmem:[#allocation10 + $0x40] sm:$0xf]
    %v522 = vld [vmem:[#allocation10 + $0x44] sm:$0xf]
    %v523 = vld [vmem:[#allocation10 + $0x48] sm:$0xf]
    %v524 = vld [vmem:[#allocation10 + $0x4c] sm:$0xf]
    %v525 = vld [vmem:[#allocation10 + $0x50] sm:$0xf]
    %v526 = vld [vmem:[#allocation10 + $0x54] sm:$0xf]
    %v527 = vld [vmem:[#allocation10 + $0x58] sm:$0xf]
    %v528 = vld [vmem:[#allocation10 + $0x5c] sm:$0xf]
    %v529 = vld [vmem:[#allocation10 + $0x60] sm:$0xf]
    %v530 = vld [vmem:[#allocation10 + $0x64] sm:$0xf]
    %v531 = vld [vmem:[#allocation10 + $0x68] sm:$0xf]
    %v532 = vld [vmem:[#allocation10 + $0x6c] sm:$0xf]
    %v533 = vld [vmem:[#allocation10 + $0x70] sm:$0xf]
    %v534 = vld [vmem:[#allocation10 + $0x74] sm:$0xf]
    %v535 = vld [vmem:[#allocation10 + $0x78] sm:$0xf]
    %v536 = vld [vmem:[#allocation10 + $0x7c] sm:$0xf]
    %v537 = vld [vmem:[%s6 + $0x2] sm:$0x1]
    %v538 = vperm.slane %v537, 0
    %v571 = vunpack.c.l.b16 %v505
    %v572 = vunpack.c.l.b16 %v506
    %v573 = vunpack.c.l.b16 %v507
    %v574 = vunpack.c.l.b16 %v508
    %v575 = vunpack.c.l.b16 %v509
    %v576 = vunpack.c.l.b16 %v510
    %v577 = vunpack.c.l.b16 %v511
    %v578 = vunpack.c.l.b16 %v512
    %v579 = vunpack.c.l.b16 %v513
    %v580 = vunpack.c.l.b16 %v514
    %v581 = vunpack.c.l.b16 %v515
    %v582 = vunpack.c.l.b16 %v516
    %v583 = vunpack.c.l.b16 %v517
    %v584 = vunpack.c.l.b16 %v518
    %v585 = vunpack.c.l.b16 %v519
    %v586 = vunpack.c.l.b16 %v520
    %v587 = vunpack.c.l.b16 %v521
    %v588 = vunpack.c.l.b16 %v522
    %v589 = vunpack.c.l.b16 %v523
    %v590 = vunpack.c.l.b16 %v524
    %v591 = vunpack.c.l.b16 %v525
    %v592 = vunpack.c.l.b16 %v526
    %v593 = vunpack.c.l.b16 %v527
    %v594 = vunpack.c.l.b16 %v528
    %v595 = vunpack.c.l.b16 %v529
    %v596 = vunpack.c.l.b16 %v530
    %v597 = vunpack.c.l.b16 %v531
    %v598 = vunpack.c.l.b16 %v532
    %v599 = vunpack.c.l.b16 %v533
    %v600 = vunpack.c.l.b16 %v534
    %v601 = vunpack.c.l.b16 %v535
    %v602 = vunpack.c.l.b16 %v536
    %v603 = vpack.c.b16 %v572, %v571
    %v604 = vpack.c.b16 %v574, %v573
    %v605 = vpack.c.b16 %v576, %v575
    %v606 = vpack.c.b16 %v578, %v577
    %v607 = vpack.c.b16 %v580, %v579
    %v608 = vpack.c.b16 %v582, %v581
    %v609 = vpack.c.b16 %v584, %v583
    %v610 = vpack.c.b16 %v586, %v585
    %v611 = vpack.c.b16 %v588, %v587
    %v612 = vpack.c.b16 %v590, %v589
    %v613 = vpack.c.b16 %v592, %v591
    %v614 = vpack.c.b16 %v594, %v593
    %v615 = vpack.c.b16 %v596, %v595
    %v616 = vpack.c.b16 %v598, %v597
    %v617 = vpack.c.b16 %v600, %v599
    %v618 = vpack.c.b16 %v602, %v601
    %635 = vmatpush.bf16.msra.mxu0 %v610
    %636 = vmatpush.bf16.msra.mxu0 %v609
    %637 = vmatpush.bf16.msra.mxu0 %v608
    %638 = vmatpush.bf16.msra.mxu0 %v607
    %639 = vmatpush.bf16.msra.mxu0 %v606
    %640 = vmatpush.bf16.msra.mxu0 %v605
    %641 = vmatpush.bf16.msra.mxu0 %v604
    %642 = vmatpush.bf16.msra.mxu0 %v603
    %643 = vmatmul.bf16.gmra.mxu0 %v503
    %v644 = vpop.f32.mrf.mxu0
    %v645 = vadd.f32 %v538, %v644
    %v646 = vpop.f32.mrf.mxu0
    %647 = vdwg.mxu0
    %648 = vmatpush.bf16.msra.mxu0 %v618
    %649 = vmatpush.bf16.msra.mxu0 %v617
    %650 = vmatpush.bf16.msra.mxu0 %v616
    %651 = vmatpush.bf16.msra.mxu0 %v615
    %652 = vmatpush.bf16.msra.mxu0 %v614
    %653 = vmatpush.bf16.msra.mxu0 %v613
    %654 = vmatpush.bf16.msra.mxu0 %v612
    %655 = vmatpush.bf16.msra.mxu0 %v611
    %656 = vmatmul.bf16.gmra.mxu0 %v504
    %v657 = vpop.f32.mrf.mxu0
    %v658 = vadd.f32 %v645, %v657
    %v659 = vpop.f32.mrf.mxu0
    %660 = vdwg.mxu0
    %v661 = vsub.f32 0.0, %v658
    %v662 = vmul.f32 %v661, 1.442695
    %v663 = vpow.pop %v662
    %v664 = vadd.f32 %v663, 1.0
    %v665 = vrcp.pop %v664
    %666 = vst.msk [vmem:[#allocation14] sm:$0xff] %vm501, %v665
    // Predicated region
    $region54: #{tpu_custom_call.1} parent=1 // pred_check
      _
    $region55: #{tpu_custom_call.1} parent=1 // pred_check_branch
      %668 = sbr.rel (0) target = $region57
    $region56: #{tpu_custom_call.1} parent=1 // pred_region
      %670 = vsyncadd [#allocation4], 0
      %s672 = sshll.u32 [#allocation13], 4
      %s673 = int_to_ptr.vmem [resolvable:$true] %s672
      %s674 = sshll.u32 %s7, 4
      %s675 = int_to_ptr.hbm [resolvable:$true] %s674
      %677 = dma.vmem_to_hbm [thread:$0]  %s673, 128, %s675, [#allocation4]
    $region57: #{tpu_custom_call.1} parent=1 // pred_fallthru
      _
    // Predicated region
    $region58: #{tpu_custom_call.1} parent=1 // pred_check
      _
    $region59: #{tpu_custom_call.1} parent=1 // pred_check_branch
      %679 = sbr.rel (0) target = $region61
    $region60: #{tpu_custom_call.1} parent=1 // pred_region
      %681 = vsyncadd [#allocation15], 0
      %s683 = sshll.u32 [#allocation14], 4
      %s684 = int_to_ptr.vmem [resolvable:$true] %s683
      %s685 = sshll.u32 %s8, 4
      %s686 = int_to_ptr.hbm [resolvable:$true] %s685
      %688 = dma.vmem_to_hbm [thread:$0]  %s684, 128, %s686, [#allocation15]
    $region61: #{tpu_custom_call.1} parent=1 // pred_fallthru
      _
    // Predicated region
    $region62: #{tpu_custom_call.1} parent=1 // pred_check
      _
    $region63: #{tpu_custom_call.1} parent=1 // pred_check_branch
      %690 = sbr.rel (0) target = $region65
    $region64: #{tpu_custom_call.1} parent=1 // pred_region
      %692 = dma.done [#allocation4], 128
    $region65: #{tpu_custom_call.1} parent=1 // pred_fallthru
      _
    // Predicated region
    $region66: #{tpu_custom_call.1} parent=1 // pred_check
      _
    $region67: #{tpu_custom_call.1} parent=1 // pred_check_branch
      %694 = sbr.rel (0) target = $region69
    $region68: #{tpu_custom_call.1} parent=1 // pred_region
      %696 = dma.done [#allocation15], 128
    $region69: #{tpu_custom_call.1} parent=1 // pred_fallthru
      _
    %697 = vsyncpa [#allocation3], 1
    %698 = vsyncpa [#allocation6], 1
    %699 = vsyncpa [#allocation9], 1
    %700 = vsyncpa [#allocation12], 1
    %701 = vsyncpa [#allocation4], 1
    %702 = vsyncpa [#allocation15], 1

</llo_original>
